<compile_context>
chip_gen: v7x
topology: tpu7x:2x2x1
jax: 0.10.0
libtpu: 0.0.40
codegen_flags: <defaults>
</compile_context>

<pallas_src>
import functools

import jax
import jax.numpy as jnp
from jax.experimental import pallas as pl
from jax.experimental.pallas import tpu as pltpu

LN_EPS = 1e-5


def _round_up(n, m):
    return ((n + m - 1) // m) * m


def _vmem_capacity_bytes():
    """Physical VMEM of the local TPU; conservative fallback if unqueryable."""
    try:
        return int(pltpu.get_tpu_info().vmem_capacity_bytes)
    except Exception:
        return 64 << 20  # v7x per-TensorCore figure (smallest modern part)


# ----------------------------------------------------------------------------
# Kernels
# ----------------------------------------------------------------------------
def _layernorm_f32(x):
    """Two-pass (stable) LayerNorm stats in f32, biased variance as in torch."""
    x = x.astype(jnp.float32)
    mean = jnp.mean(x, axis=-1, keepdims=True)
    xc = x - mean
    var = jnp.mean(xc * xc, axis=-1, keepdims=True)
    return xc * jax.lax.rsqrt(var + LN_EPS)


def _mln_kernel_fused(x_ref, c_ref, wr_ref, br_ref, wgb_ref, bgb_ref, o_ref, *,
                      f_dim):
    """gamma/beta heads fused into one [f_dim, 2*f_dim] matmul (f_dim % 128 == 0)."""
    xn = _layernorm_f32(x_ref[...])

    mxu_dtype = wr_ref.dtype
    c = c_ref[...].astype(mxu_dtype)
    h = jnp.dot(c, wr_ref[...], preferred_element_type=jnp.float32) + br_ref[...]
    h = jnp.maximum(h, 0.0).astype(mxu_dtype)

    gb = jnp.dot(h, wgb_ref[...], preferred_element_type=jnp.float32) + bgb_ref[...]
    gamma = gb[:, :f_dim]          # lane-aligned split (f_dim % 128 == 0)
    beta = gb[:, f_dim:]

    o_ref[...] = (gamma * xn + beta).astype(o_ref.dtype)


def _mln_kernel_split(x_ref, c_ref, wr_ref, br_ref, wg_ref, bg_ref, wb_ref,
                      bb_ref, o_ref):
    """Separate gamma/beta dots: used when f_dim is not a multiple of 128."""
    xn = _layernorm_f32(x_ref[...])

    mxu_dtype = wr_ref.dtype
    c = c_ref[...].astype(mxu_dtype)
    h = jnp.dot(c, wr_ref[...], preferred_element_type=jnp.float32) + br_ref[...]
    h = jnp.maximum(h, 0.0).astype(mxu_dtype)

    gamma = jnp.dot(h, wg_ref[...], preferred_element_type=jnp.float32) + bg_ref[...]
    beta = jnp.dot(h, wb_ref[...], preferred_element_type=jnp.float32) + bb_ref[...]

    o_ref[...] = (gamma * xn + beta).astype(o_ref.dtype)


# ----------------------------------------------------------------------------
# Wrapper
# ----------------------------------------------------------------------------
def prepare_mln_params(params, mxu_dtype=jnp.bfloat16):
    """One-time weight packing (hoisted out of the per-call path).

    Weights are stored [in, out]; the gamma/beta heads are fused into a single
    [f_dim, 2*f_dim] slab only when f_dim is a multiple of 128 (lane-aligned
    split in the kernel); biases stay f32.
    """
    wr, br, wg, bg, wb, bb = (params["wr"], params["br"], params["wg"],
                              params["bg"], params["wb"], params["bb"])
    c_dim, f_dim = wr.shape
    prepared = {
        "wr": wr.astype(mxu_dtype),
        "br": br.astype(jnp.float32).reshape(1, f_dim),
    }
    if f_dim % 128 == 0:
        prepared["wgb"] = jnp.concatenate([wg, wb], axis=1).astype(mxu_dtype)
        prepared["bgb"] = jnp.concatenate([bg, bb]).astype(jnp.float32).reshape(1, 2 * f_dim)
    else:
        prepared["wg"] = wg.astype(mxu_dtype)
        prepared["bg"] = bg.astype(jnp.float32).reshape(1, f_dim)
        prepared["wb"] = wb.astype(mxu_dtype)
        prepared["bb"] = bb.astype(jnp.float32).reshape(1, f_dim)
    return prepared


def _estimate_vmem_bytes(tm_eff, *, f_dim, c_dim, x_itemsize, c_itemsize,
                         w_itemsize, single_buffer_weights):
    # Double-buffered row streams: x tile, out tile, c tile.
    tiles = 2 * tm_eff * (2 * f_dim * x_itemsize + c_dim * c_itemsize)
    # Invariant weights/biases (fused head is the upper bound: Wr + [Wg|Wb]).
    wbuf = 1 if single_buffer_weights else 2
    weights = wbuf * ((c_dim * f_dim + 2 * f_dim * f_dim) * w_itemsize
                      + 4 * 3 * f_dim)
    # f32 intermediates in the body: xn (f), h (f), gb (2f) + epilogue temps.
    scratch = tm_eff * 6 * f_dim * 4
    return tiles + weights + scratch


@functools.partial(jax.jit, static_argnames=("tm", "single_buffer_weights"))
def _mln_forward_impl(x, c, prepared, *, tm, single_buffer_weights):
    wr = prepared["wr"]
    c_dim, f_dim = wr.shape
    fused = "wgb" in prepared

    lead = x.shape[:-1]
    x2 = x.reshape(-1, f_dim)
    c2 = c.reshape(-1, c_dim)
    m = x2.shape[0]

    # --- per-generation tiling / VMEM budget ---------------------------------
    vmem_cap = _vmem_capacity_bytes()
    budget = max(32 << 20, vmem_cap - (12 << 20))       # leave headroom (v7x!)
    if tm is None:
        tm = 1024 if vmem_cap >= (96 << 20) else 512     # v5e/v6e vs v7x
    tm_eff = min(tm, _round_up(m, 8))                    # row block: multiple of 8
    est = functools.partial(
        _estimate_vmem_bytes, f_dim=f_dim, c_dim=c_dim,
        x_itemsize=x2.dtype.itemsize, c_itemsize=c2.dtype.itemsize,
        w_itemsize=wr.dtype.itemsize,
        single_buffer_weights=single_buffer_weights)
    while tm_eff > 256 and est(tm_eff) > budget:
        tm_eff //= 2
    vmem_bytes = int(min(budget, max(32 << 20, int(1.25 * est(tm_eff)))))

    # Ragged last block handled by Pallas (no jnp.pad second pass over x/c).
    grid = (pl.cdiv(m, tm_eff),)

    row_spec = lambda last: pl.BlockSpec((tm_eff, last), lambda i: (i, 0))
    if single_buffer_weights:
        # Constant index_map -> fetched once; single-buffer to halve residency.
        w_spec = lambda shp: pl.BlockSpec(shp, lambda i: (0, 0),
                                          pipeline_mode=pl.Buffered(1))
    else:
        w_spec = lambda shp: pl.BlockSpec(shp, lambda i: (0, 0))

    if fused:
        kernel = functools.partial(_mln_kernel_fused, f_dim=f_dim)
        w_specs = [w_spec((c_dim, f_dim)), w_spec((1, f_dim)),
                   w_spec((f_dim, 2 * f_dim)), w_spec((1, 2 * f_dim))]
        w_args = (prepared["wr"], prepared["br"], prepared["wgb"], prepared["bgb"])
    else:
        kernel = _mln_kernel_split
        w_specs = [w_spec((c_dim, f_dim)), w_spec((1, f_dim)),
                   w_spec((f_dim, f_dim)), w_spec((1, f_dim)),
                   w_spec((f_dim, f_dim)), w_spec((1, f_dim))]
        w_args = (prepared["wr"], prepared["br"], prepared["wg"], prepared["bg"],
                  prepared["wb"], prepared["bb"])

    w_hbm_bytes = sum(int(v.size) * v.dtype.itemsize for v in w_args)
    cost = pl.CostEstimate(
        flops=2 * m * (c_dim * f_dim + 2 * f_dim * f_dim) + 8 * m * f_dim,
        transcendentals=m,                                   # one rsqrt per row
        bytes_accessed=(x2.size * x2.dtype.itemsize
                        + c2.size * c2.dtype.itemsize
                        + m * f_dim * x2.dtype.itemsize
                        + w_hbm_bytes),
    )

    out = pl.pallas_call(
        kernel,
        out_shape=jax.ShapeDtypeStruct((m, f_dim), x.dtype),
        grid_spec=pltpu.PrefetchScalarGridSpec(
            num_scalar_prefetch=0,
            grid=grid,
            in_specs=[row_spec(f_dim), row_spec(c_dim), *w_specs],
            out_specs=row_spec(f_dim),
        ),
        compiler_params=pltpu.CompilerParams(
            dimension_semantics=("parallel",),   # row axis -> megacore on v7x
            vmem_limit_bytes=vmem_bytes,
        ),
        cost_estimate=cost,
    )(x2, c2, *w_args)

    return out.reshape(*lead, f_dim)


_SINGLE_BUFFER_WEIGHTS_OK = None  # resolved lazily on the first forward


def mln_forward(x, c, prepared, *, tm=None):
    """x: [..., f_dim], c: [..., c_dim] (same leading dims); f32 or bf16.

    `prepared` comes from prepare_mln_params(); the MXU dtype is taken from the
    packed weights.  Output dtype matches x.  `tm=None` picks the row tile per
    TPU generation.
    """
    global _SINGLE_BUFFER_WEIGHTS_OK
    if _SINGLE_BUFFER_WEIGHTS_OK is None:
        # Feature-detect pipeline_mode=pl.Buffered(1) on pallas_call BlockSpecs;
        # fall back to default double-buffering if this Pallas build rejects it.
        try:
            out = _mln_forward_impl(x, c, prepared, tm=tm,
                                    single_buffer_weights=True)
            jax.block_until_ready(out)
            _SINGLE_BUFFER_WEIGHTS_OK = True
            return out
        except Exception:
            _SINGLE_BUFFER_WEIGHTS_OK = False
    return _mln_forward_impl(x, c, prepared, tm=tm,
                             single_buffer_weights=_SINGLE_BUFFER_WEIGHTS_OK)


# ----------------------------------------------------------------------------
# Parameter helpers + pure-JAX reference
# ----------------------------------------------------------------------------
def init_mln_params(key, c_dim, f_dim, dtype=jnp.float32):
    """Matches MLN.reset_parameters: reduce.Linear keeps torch's fan-in uniform
    init; gamma/beta weights zero, gamma bias = 1, beta bias = 0."""
    k1, k2 = jax.random.split(key)
    bound = 1.0 / (c_dim ** 0.5)
    return dict(
        wr=jax.random.uniform(k1, (c_dim, f_dim), dtype, -bound, bound),  # [in, out]
        br=jax.random.uniform(k2, (f_dim,), dtype, -bound, bound),
        wg=jnp.zeros((f_dim, f_dim), dtype), bg=jnp.ones((f_dim,), dtype),
        wb=jnp.zeros((f_dim, f_dim), dtype), bb=jnp.zeros((f_dim,), dtype),
    )


def random_mln_params(key, c_dim, f_dim, dtype=jnp.float32):
    """Random weights for all three linears (exercises every matmul)."""
    ks = jax.random.split(key, 6)
    bc = 1.0 / (c_dim ** 0.5)
    bf = 1.0 / (f_dim ** 0.5)
    return dict(
        wr=jax.random.uniform(ks[0], (c_dim, f_dim), dtype, -bc, bc),
        br=jax.random.uniform(ks[1], (f_dim,), dtype, -bc, bc),
        wg=jax.random.uniform(ks[2], (f_dim, f_dim), dtype, -bf, bf),
        bg=jax.random.uniform(ks[3], (f_dim,), dtype, -bf, bf),
        wb=jax.random.uniform(ks[4], (f_dim, f_dim), dtype, -bf, bf),
        bb=jax.random.uniform(ks[5], (f_dim,), dtype, -bf, bf),
    )


def mln_reference(x, c, params, precision=jax.lax.Precision.HIGHEST):
    """Pure-JAX f32 reference (HIGHEST matmul precision) for correctness checks."""
    x = x.astype(jnp.float32)
    c = c.astype(jnp.float32)
    mean = jnp.mean(x, axis=-1, keepdims=True)
    var = jnp.mean((x - mean) ** 2, axis=-1, keepdims=True)
    xn = (x - mean) * jax.lax.rsqrt(var + LN_EPS)
    h = jnp.maximum(
        jnp.dot(c, params["wr"].astype(jnp.float32), precision=precision)
        + params["br"].astype(jnp.float32), 0.0)
    gamma = jnp.dot(h, params["wg"].astype(jnp.float32), precision=precision) \
        + params["bg"].astype(jnp.float32)
    beta = jnp.dot(h, params["wb"].astype(jnp.float32), precision=precision) \
        + params["bb"].astype(jnp.float32)
    return gamma * xn + beta


# ----------------------------------------------------------------------------
# Smoke tests
# ----------------------------------------------------------------------------
if __name__ == "__main__":
    key = jax.random.PRNGKey(0)
    kx, kc, kp1, kp2, kx2, kc2, kp3, kx3, kc3 = jax.random.split(key, 9)

    # --- case 1: fused head (f_dim % 128 == 0), PyTorch reset-state params ---
    C_DIM, F_DIM = 32, 128
    B, N = 2, 8
    x = jax.random.normal(kx, (B, N, F_DIM), jnp.float32)
    c = jax.random.normal(kc, (B, N, C_DIM), jnp.float32)
    params0 = init_mln_params(kp1, C_DIM, F_DIM)
    prep0_f32 = prepare_mln_params(params0, mxu_dtype=jnp.float32)
    out0 = jax.block_until_ready(mln_forward(x, c, prep0_f32))
    ref0 = mln_reference(x, c, params0)
    assert out0.shape == (B, N, F_DIM)
    assert jnp.allclose(out0, ref0, atol=1e-5, rtol=1e-5), "reset-state LN mismatch"

    # --- case 2: random params, ragged row count (111 rows), bf16/f32 MXU ----
    B2, N2 = 3, 37
    x2 = jax.random.normal(kx2, (B2, N2, F_DIM), jnp.float32)
    c2 = jax.random.normal(kc2, (B2, N2, C_DIM), jnp.float32)
    params1 = random_mln_params(kp2, C_DIM, F_DIM)
    prep1_bf16 = prepare_mln_params(params1, mxu_dtype=jnp.bfloat16)
    prep1_f32 = prepare_mln_params(params1, mxu_dtype=jnp.float32)
    ref1 = mln_reference(x2, c2, params1)

    out1 = jax.block_until_ready(mln_forward(x2, c2, prep1_bf16))
    assert out1.shape == (B2, N2, F_DIM)
    err1 = float(jnp.max(jnp.abs(out1 - ref1)))
    assert err1 < 1e-1, f"bf16-MXU path mismatch, max abs err = {err1}"

    out1f = jax.block_until_ready(mln_forward(x2, c2, prep1_f32))
    err1f = float(jnp.max(jnp.abs(out1f - ref1)))
    assert err1f < 1e-2, f"f32-MXU path mismatch, max abs err = {err1f}"

    # --- case 3: bf16 activation I/O (halves the dominant HBM streams) -------
    x2b = x2.astype(jnp.bfloat16)
    c2b = c2.astype(jnp.bfloat16)
    out_bf = jax.block_until_ready(mln_forward(x2b, c2b, prep1_bf16))
    assert out_bf.dtype == jnp.bfloat16
    ref_bf = mln_reference(x2b, c2b, params1)
    err_bf = float(jnp.max(jnp.abs(out_bf.astype(jnp.float32) - ref_bf)))
    assert err_bf < 1.5e-1, f"bf16 I/O path mismatch, max abs err = {err_bf}"

    # --- case 4: f_dim NOT a multiple of 128 -> lane-safe un-fused head ------
    C3, F3 = 24, 192
    B3, N3 = 2, 11
    x3 = jax.random.normal(kx3, (B3, N3, F3), jnp.float32)
    c3 = jax.random.normal(kc3, (B3, N3, C3), jnp.float32)
    params2 = random_mln_params(kp3, C3, F3)
    prep2_f32 = prepare_mln_params(params2, mxu_dtype=jnp.float32)
    out3 = jax.block_until_ready(mln_forward(x3, c3, prep2_f32))
    ref3 = mln_reference(x3, c3, params2)
    assert out3.shape == (B3, N3, F3)
    err3 = float(jnp.max(jnp.abs(out3 - ref3)))
    assert err3 < 1e-2, f"split-head path mismatch, max abs err = {err3}"

    print("KERNEL_OK")
</pallas_src>

<mosaic_0001>
module attributes {stable_mosaic.version = 11 : i64} {
  func.func @_mln_kernel_fused(%arg0: i32, %arg1: memref<16x128xf32, #tpu.memory_space<vmem>>, %arg2: memref<16x32xf32, #tpu.memory_space<vmem>>, %arg3: memref<32x128xf32, #tpu.memory_space<vmem>>, %arg4: memref<1x128xf32, #tpu.memory_space<vmem>>, %arg5: memref<128x256xf32, #tpu.memory_space<vmem>>, %arg6: memref<1x256xf32, #tpu.memory_space<vmem>>, %arg7: memref<16x128xf32, #tpu.memory_space<vmem>>) attributes {dimension_semantics = [#tpu.dimension_semantics<parallel>], iteration_bounds = array<i64: 1>, scalar_prefetch = 0 : i64, scratch_operands = 0 : i64, tpu.core_type = #tpu.core_type<tc>, window_params = [{transform_indices = @transform_0, window_bounds = array<i64: 16, 128>}, {transform_indices = @transform_1, window_bounds = array<i64: 16, 32>}, {pipeline_mode = #tpu.pipeline_mode<synchronous>, transform_indices = @transform_2, window_bounds = array<i64: 32, 128>}, {pipeline_mode = #tpu.pipeline_mode<synchronous>, transform_indices = @transform_3, window_bounds = array<i64: 1, 128>}, {pipeline_mode = #tpu.pipeline_mode<synchronous>, transform_indices = @transform_4, window_bounds = array<i64: 128, 256>}, {pipeline_mode = #tpu.pipeline_mode<synchronous>, transform_indices = @transform_5, window_bounds = array<i64: 1, 256>}, {transform_indices = @transform_6, window_bounds = array<i64: 16, 128>}]} {
    %c0 = arith.constant 0 : index
    %c0_0 = arith.constant 0 : index
    %0 = vector.load %arg1[%c0, %c0_0] : memref<16x128xf32, #tpu.memory_space<vmem>>, vector<16x128xf32>
    %cst = arith.constant dense<0.000000e+00> : vector<16xf32>
    %1 = vector.multi_reduction <add>, %0, %cst [1] : vector<16x128xf32> to vector<16xf32>
    %2 = vector.shape_cast %1 : vector<16xf32> to vector<16x1xf32>
    %cst_1 = arith.constant 1.280000e+02 : f32
    %3 = vector.broadcast %cst_1 : f32 to vector<16x1xf32>
    %4 = arith.divf %2, %3 : vector<16x1xf32>
    %5 = vector.broadcast %4 : vector<16x1xf32> to vector<16x128xf32>
    %6 = arith.subf %0, %5 : vector<16x128xf32>
    %7 = arith.mulf %6, %6 : vector<16x128xf32>
    %cst_2 = arith.constant dense<0.000000e+00> : vector<16xf32>
    %8 = vector.multi_reduction <add>, %7, %cst_2 [1] : vector<16x128xf32> to vector<16xf32>
    %9 = vector.shape_cast %8 : vector<16xf32> to vector<16x1xf32>
    %cst_3 = arith.constant 1.280000e+02 : f32
    %10 = vector.broadcast %cst_3 : f32 to vector<16x1xf32>
    %11 = arith.divf %9, %10 : vector<16x1xf32>
    %cst_4 = arith.constant 9.99999974E-6 : f32
    %12 = vector.broadcast %cst_4 : f32 to vector<16x1xf32>
    %13 = arith.addf %11, %12 : vector<16x1xf32>
    %14 = math.rsqrt %13 : vector<16x1xf32>
    %15 = vector.broadcast %14 : vector<16x1xf32> to vector<16x128xf32>
    %16 = arith.mulf %6, %15 : vector<16x128xf32>
    %c0_5 = arith.constant 0 : index
    %c0_6 = arith.constant 0 : index
    %17 = vector.load %arg2[%c0_5, %c0_6] : memref<16x32xf32, #tpu.memory_space<vmem>>, vector<16x32xf32>
    %c0_7 = arith.constant 0 : index
    %c0_8 = arith.constant 0 : index
    %18 = vector.load %arg3[%c0_7, %c0_8] : memref<32x128xf32, #tpu.memory_space<vmem>>, vector<32x128xf32>
    %cst_9 = arith.constant dense<0.000000e+00> : vector<16x128xf32>
    %19 = tpu.matmul %17, %18, %cst_9 {dimension_numbers = #tpu.dot_dimension_numbers<[1], [0], [0], [1], [0, 0, 1, 1], [], []>} : vector<16x32xf32>, vector<32x128xf32>, vector<16x128xf32> -> vector<16x128xf32>
    %c0_10 = arith.constant 0 : index
    %c0_11 = arith.constant 0 : index
    %20 = vector.load %arg4[%c0_10, %c0_11] : memref<1x128xf32, #tpu.memory_space<vmem>>, vector<1x128xf32>
    %21 = vector.broadcast %20 : vector<1x128xf32> to vector<16x128xf32>
    %22 = arith.addf %19, %21 : vector<16x128xf32>
    %cst_12 = arith.constant 0.000000e+00 : f32
    %23 = vector.broadcast %cst_12 : f32 to vector<16x128xf32>
    %24 = arith.maximumf %22, %23 : vector<16x128xf32>
    %c0_13 = arith.constant 0 : index
    %c0_14 = arith.constant 0 : index
    %25 = vector.load %arg5[%c0_13, %c0_14] : memref<128x256xf32, #tpu.memory_space<vmem>>, vector<128x256xf32>
    %cst_15 = arith.constant dense<0.000000e+00> : vector<16x256xf32>
    %26 = tpu.matmul %24, %25, %cst_15 {dimension_numbers = #tpu.dot_dimension_numbers<[1], [0], [0], [1], [0, 0, 1, 1], [], []>} : vector<16x128xf32>, vector<128x256xf32>, vector<16x256xf32> -> vector<16x256xf32>
    %c0_16 = arith.constant 0 : index
    %c0_17 = arith.constant 0 : index
    %27 = vector.load %arg6[%c0_16, %c0_17] : memref<1x256xf32, #tpu.memory_space<vmem>>, vector<1x256xf32>
    %28 = vector.broadcast %27 : vector<1x256xf32> to vector<16x256xf32>
    %29 = arith.addf %26, %28 : vector<16x256xf32>
    %30 = vector.extract_strided_slice %29 {offsets = [0, 0], sizes = [16, 128], strides = [1, 1]} : vector<16x256xf32> to vector<16x128xf32>
    %31 = vector.extract_strided_slice %29 {offsets = [0, 128], sizes = [16, 128], strides = [1, 1]} : vector<16x256xf32> to vector<16x128xf32>
    %32 = arith.mulf %30, %16 : vector<16x128xf32>
    %33 = arith.addf %32, %31 : vector<16x128xf32>
    %c0_18 = arith.constant 0 : index
    %c0_19 = arith.constant 0 : index
    %34 = vector.load %arg7[%c0_18, %c0_19] : memref<16x128xf32, #tpu.memory_space<vmem>>, vector<16x128xf32>
    tpu.vector_store %arg7[%c0_18, %c0_19], %33 {strides = array<i32>} : memref<16x128xf32, #tpu.memory_space<vmem>>, vector<16x128xf32>,
    return
  }
  func.func @transform_0(%arg0: i32) -> (i32, i32) {
    %c0_i32 = arith.constant 0 : i32
    %c0_i32_0 = arith.constant 0 : i32
    return %arg0, %c0_i32 : i32, i32
  }
  func.func @transform_1(%arg0: i32) -> (i32, i32) {
    %c0_i32 = arith.constant 0 : i32
    %c0_i32_0 = arith.constant 0 : i32
    return %arg0, %c0_i32 : i32, i32
  }
  func.func @transform_2(%arg0: i32) -> (i32, i32) {
    %c0_i32 = arith.constant 0 : i32
    %c0_i32_0 = arith.constant 0 : i32
    %c0_i32_1 = arith.constant 0 : i32
    return %c0_i32, %c0_i32_0 : i32, i32
  }
  func.func @transform_3(%arg0: i32) -> (i32, i32) {
    %c0_i32 = arith.constant 0 : i32
    %c0_i32_0 = arith.constant 0 : i32
    %c0_i32_1 = arith.constant 0 : i32
    return %c0_i32, %c0_i32_0 : i32, i32
  }
  func.func @transform_4(%arg0: i32) -> (i32, i32) {
    %c0_i32 = arith.constant 0 : i32
    %c0_i32_0 = arith.constant 0 : i32
    %c0_i32_1 = arith.constant 0 : i32
    return %c0_i32, %c0_i32_0 : i32, i32
  }
  func.func @transform_5(%arg0: i32) -> (i32, i32) {
    %c0_i32 = arith.constant 0 : i32
    %c0_i32_0 = arith.constant 0 : i32
    %c0_i32_1 = arith.constant 0 : i32
    return %c0_i32, %c0_i32_0 : i32, i32
  }
  func.func @transform_6(%arg0: i32) -> (i32, i32) {
    %c0_i32 = arith.constant 0 : i32
    %c0_i32_0 = arith.constant 0 : i32
    return %arg0, %c0_i32 : i32, i32
  }
}

module attributes {stable_mosaic.version = 11 : i64} {
  func.func @_mln_kernel_fused(%arg0: i32, %arg1: memref<16x128xf32, #tpu.memory_space<vmem>>, %arg2: memref<16x32xf32, #tpu.memory_space<vmem>>, %arg3: memref<32x128xf32, #tpu.memory_space<vmem>>, %arg4: memref<1x128xf32, #tpu.memory_space<vmem>>, %arg5: memref<128x256xf32, #tpu.memory_space<vmem>>, %arg6: memref<1x256xf32, #tpu.memory_space<vmem>>, %arg7: memref<16x128xf32, #tpu.memory_space<vmem>>) attributes {dimension_semantics = [#tpu.dimension_semantics<parallel>], iteration_bounds = array<i64: 1>, scalar_prefetch = 0 : i64, scratch_operands = 0 : i64, tpu.core_type = #tpu.core_type<tc>, window_params = [{transform_indices = @transform_0, window_bounds = array<i64: 16, 128>}, {transform_indices = @transform_1, window_bounds = array<i64: 16, 32>}, {pipeline_mode = #tpu.pipeline_mode<synchronous>, transform_indices = @transform_2, window_bounds = array<i64: 32, 128>}, {pipeline_mode = #tpu.pipeline_mode<synchronous>, transform_indices = @transform_3, window_bounds = array<i64: 1, 128>}, {pipeline_mode = #tpu.pipeline_mode<synchronous>, transform_indices = @transform_4, window_bounds = array<i64: 128, 256>}, {pipeline_mode = #tpu.pipeline_mode<synchronous>, transform_indices = @transform_5, window_bounds = array<i64: 1, 256>}, {transform_indices = @transform_6, window_bounds = array<i64: 16, 128>}]} {
    %c0 = arith.constant 0 : index
    %c0_0 = arith.constant 0 : index
    %0 = vector.load %arg1[%c0, %c0_0] : memref<16x128xf32, #tpu.memory_space<vmem>>, vector<16x128xf32>
    %cst = arith.constant dense<0.000000e+00> : vector<16xf32>
    %1 = vector.multi_reduction <add>, %0, %cst [1] : vector<16x128xf32> to vector<16xf32>
    %2 = vector.shape_cast %1 : vector<16xf32> to vector<16x1xf32>
    %cst_1 = arith.constant 1.280000e+02 : f32
    %3 = vector.broadcast %cst_1 : f32 to vector<16x1xf32>
    %4 = arith.divf %2, %3 : vector<16x1xf32>
    %5 = vector.broadcast %4 : vector<16x1xf32> to vector<16x128xf32>
    %6 = arith.subf %0, %5 : vector<16x128xf32>
    %7 = arith.mulf %6, %6 : vector<16x128xf32>
    %cst_2 = arith.constant dense<0.000000e+00> : vector<16xf32>
    %8 = vector.multi_reduction <add>, %7, %cst_2 [1] : vector<16x128xf32> to vector<16xf32>
    %9 = vector.shape_cast %8 : vector<16xf32> to vector<16x1xf32>
    %cst_3 = arith.constant 1.280000e+02 : f32
    %10 = vector.broadcast %cst_3 : f32 to vector<16x1xf32>
    %11 = arith.divf %9, %10 : vector<16x1xf32>
    %cst_4 = arith.constant 9.99999974E-6 : f32
    %12 = vector.broadcast %cst_4 : f32 to vector<16x1xf32>
    %13 = arith.addf %11, %12 : vector<16x1xf32>
    %14 = math.rsqrt %13 : vector<16x1xf32>
    %15 = vector.broadcast %14 : vector<16x1xf32> to vector<16x128xf32>
    %16 = arith.mulf %6, %15 : vector<16x128xf32>
    %c0_5 = arith.constant 0 : index
    %c0_6 = arith.constant 0 : index
    %17 = vector.load %arg2[%c0_5, %c0_6] : memref<16x32xf32, #tpu.memory_space<vmem>>, vector<16x32xf32>
    %c0_7 = arith.constant 0 : index
    %c0_8 = arith.constant 0 : index
    %18 = vector.load %arg3[%c0_7, %c0_8] : memref<32x128xf32, #tpu.memory_space<vmem>>, vector<32x128xf32>
    %cst_9 = arith.constant dense<0.000000e+00> : vector<16x128xf32>
    %19 = tpu.matmul %17, %18, %cst_9 {dimension_numbers = #tpu.dot_dimension_numbers<[1], [0], [0], [1], [0, 0, 1, 1], [], []>} : vector<16x32xf32>, vector<32x128xf32>, vector<16x128xf32> -> vector<16x128xf32>
    %c0_10 = arith.constant 0 : index
    %c0_11 = arith.constant 0 : index
    %20 = vector.load %arg4[%c0_10, %c0_11] : memref<1x128xf32, #tpu.memory_space<vmem>>, vector<1x128xf32>
    %21 = vector.broadcast %20 : vector<1x128xf32> to vector<16x128xf32>
    %22 = arith.addf %19, %21 : vector<16x128xf32>
    %cst_12 = arith.constant 0.000000e+00 : f32
    %23 = vector.broadcast %cst_12 : f32 to vector<16x128xf32>
    %24 = arith.maximumf %22, %23 : vector<16x128xf32>
    %c0_13 = arith.constant 0 : index
    %c0_14 = arith.constant 0 : index
    %25 = vector.load %arg5[%c0_13, %c0_14] : memref<128x256xf32, #tpu.memory_space<vmem>>, vector<128x256xf32>
    %cst_15 = arith.constant dense<0.000000e+00> : vector<16x256xf32>
    %26 = tpu.matmul %24, %25, %cst_15 {dimension_numbers = #tpu.dot_dimension_numbers<[1], [0], [0], [1], [0, 0, 1, 1], [], []>} : vector<16x128xf32>, vector<128x256xf32>, vector<16x256xf32> -> vector<16x256xf32>
    %c0_16 = arith.constant 0 : index
    %c0_17 = arith.constant 0 : index
    %27 = vector.load %arg6[%c0_16, %c0_17] : memref<1x256xf32, #tpu.memory_space<vmem>>, vector<1x256xf32>
    %28 = vector.broadcast %27 : vector<1x256xf32> to vector<16x256xf32>
    %29 = arith.addf %26, %28 : vector<16x256xf32>
    %30 = vector.extract_strided_slice %29 {offsets = [0, 0], sizes = [16, 128], strides = [1, 1]} : vector<16x256xf32> to vector<16x128xf32>
    %31 = vector.extract_strided_slice %29 {offsets = [0, 128], sizes = [16, 128], strides = [1, 1]} : vector<16x256xf32> to vector<16x128xf32>
    %32 = arith.mulf %30, %16 : vector<16x128xf32>
    %33 = arith.addf %32, %31 : vector<16x128xf32>
    %c0_18 = arith.constant 0 : index
    %c0_19 = arith.constant 0 : index
    %34 = vector.load %arg7[%c0_18, %c0_19] : memref<16x128xf32, #tpu.memory_space<vmem>>, vector<16x128xf32>
    tpu.vector_store %arg7[%c0_18, %c0_19], %33 {strides = array<i32>} : memref<16x128xf32, #tpu.memory_space<vmem>>, vector<16x128xf32>,
    return
  }
  func.func @transform_0(%arg0: i32) -> (i32, i32) {
    %c0_i32 = arith.constant 0 : i32
    %c0_i32_0 = arith.constant 0 : i32
    return %arg0, %c0_i32 : i32, i32
  }
  func.func @transform_1(%arg0: i32) -> (i32, i32) {
    %c0_i32 = arith.constant 0 : i32
    %c0_i32_0 = arith.constant 0 : i32
    return %arg0, %c0_i32 : i32, i32
  }
  func.func @transform_2(%arg0: i32) -> (i32, i32) {
    %c0_i32 = arith.constant 0 : i32
    %c0_i32_0 = arith.constant 0 : i32
    %c0_i32_1 = arith.constant 0 : i32
    return %c0_i32, %c0_i32_0 : i32, i32
  }
  func.func @transform_3(%arg0: i32) -> (i32, i32) {
    %c0_i32 = arith.constant 0 : i32
    %c0_i32_0 = arith.constant 0 : i32
    %c0_i32_1 = arith.constant 0 : i32
    return %c0_i32, %c0_i32_0 : i32, i32
  }
  func.func @transform_4(%arg0: i32) -> (i32, i32) {
    %c0_i32 = arith.constant 0 : i32
    %c0_i32_0 = arith.constant 0 : i32
    %c0_i32_1 = arith.constant 0 : i32
    return %c0_i32, %c0_i32_0 : i32, i32
  }
  func.func @transform_5(%arg0: i32) -> (i32, i32) {
    %c0_i32 = arith.constant 0 : i32
    %c0_i32_0 = arith.constant 0 : i32
    %c0_i32_1 = arith.constant 0 : i32
    return %c0_i32, %c0_i32_0 : i32, i32
  }
  func.func @transform_6(%arg0: i32) -> (i32, i32) {
    %c0_i32 = arith.constant 0 : i32
    %c0_i32_0 = arith.constant 0 : i32
    return %arg0, %c0_i32 : i32, i32
  }
}

</mosaic_0001>

<llo_original>
// kernel: _mln_forward_impl.1
$region0: #{_mln_forward_impl.1}
  #allocation0 [shape = 'u32[]', space=smem, size = 0x4, offset = 0x4, fixed_abs, tag = 'smem constant byte address 0x4 - core index']
  #allocation1 [shape = 'u32[144,128]{1,0:T(1,128)}', space=vmem, size = 0x12000, scoped, tag = 'internal scratch']
  %s0 = inlined_call_operand.hbm [shape: f32[16,128], index: 0, kind: input, shape index: {}]
  %s1 = inlined_call_operand.hbm [shape: f32[16,32], index: 1, kind: input, shape index: {}]
  %s2 = inlined_call_operand.hbm [shape: f32[32,128], index: 2, kind: input, shape index: {}]
  %s3 = inlined_call_operand.vmem [shape: f32[1,128], index: 3, kind: input, shape index: {}]
  %s4 = inlined_call_operand.hbm [shape: f32[128,256], index: 4, kind: input, shape index: {}]
  %s5 = inlined_call_operand.vmem [shape: f32[1,256], index: 5, kind: input, shape index: {}]
  %s6 = inlined_call_operand.hbm [shape: f32[16,128], index: 6, kind: output, shape index: {}]
  %s7 = sld [smem:[#allocation0]]
  $region50: #{_mln_forward_impl.1} parent=0
    _
  %s9 = ssub.s32 1, %s7
  %s10 = scalar_select 0, %s9, %s7
  $region1: #{_mln_forward_impl.1} parent=0
    #allocation2 [shape = 'u8[8192]{0}', space=vmem, size = 0x2000, scoped, tag = 'input window, operand 0, single buffered']
    #allocation3 [shape = 's32[1]{0}', space=sflag, size = 0x4, scoped, tag = 'scoped memory for _mln_forward_impl.1']
    #allocation4 [shape = 's32[1]{0}', space=sflag, size = 0x4, scoped, tag = 'scoped memory for _mln_forward_impl.1']
    #allocation5 [shape = 'u8[8192]{0}', space=vmem, size = 0x2000, scoped, tag = 'input window, operand 1, single buffered']
    #allocation6 [shape = 's32[1]{0}', space=sflag, size = 0x4, scoped, tag = 'scoped memory for _mln_forward_impl.1']
    #allocation7 [shape = 'u8[16384]{0}', space=vmem, size = 0x4000, scoped, tag = 'input window, operand 2, single buffered']
    #allocation8 [shape = 'u8[131072]{0}', space=vmem, size = 0x20000, scoped, tag = 'input window, operand 4, single buffered']
    #allocation9 [shape = 's32[1]{0}', space=sflag, size = 0x4, scoped, tag = 'scoped memory for _mln_forward_impl.1']
    #allocation10 [shape = 'u8[8192]{0}', space=vmem, size = 0x2000, scoped, tag = 'output window, operand 0, single buffered']
    %11 = vsyncpa [#allocation3], 0
    %12 = vsyncpa [#allocation6], 0
    %13 = vsyncpa [#allocation9], 0
    %14 = vsyncpa [#allocation4], 0
    // Predicated region
    $region2: #{_mln_forward_impl.1} parent=1 // pred_check
      _
    $region3: #{_mln_forward_impl.1} parent=1 // pred_check_branch
      %16 = sbr.rel (0) target = $region5
    $region4: #{_mln_forward_impl.1} parent=1 // pred_region
      %s18 = ssub.s32 256, 256
      %19 = vsyncadd [#allocation3], %s18
      %s20 = sshll.u32 [#allocation2], 4
      %s21 = int_to_ptr.vmem [resolvable:$true] %s20
      %26 = dma.hbm_to_vmem [thread:$0]  %s0, 256, %s21, [#allocation3], 128, 128, 8
    $region5: #{_mln_forward_impl.1} parent=1 // pred_fallthru
      _
    // Predicated region
    $region6: #{_mln_forward_impl.1} parent=1 // pred_check
      _
    $region7: #{_mln_forward_impl.1} parent=1 // pred_check_branch
      %28 = sbr.rel (0) target = $region9
    $region8: #{_mln_forward_impl.1} parent=1 // pred_region
      %s30 = ssub.s32 256, 256
      %31 = vsyncadd [#allocation6], %s30
      %s32 = sshll.u32 [#allocation5], 4
      %s33 = int_to_ptr.vmem [resolvable:$true] %s32
      %38 = dma.hbm_to_vmem [thread:$0]  %s1, 256, %s33, [#allocation6], 128, 128, 8
    $region9: #{_mln_forward_impl.1} parent=1 // pred_fallthru
      _
    // Predicated region
    $region10: #{_mln_forward_impl.1} parent=1 // pred_check
      _
    $region11: #{_mln_forward_impl.1} parent=1 // pred_check_branch
      %40 = sbr.rel (0) target = $region13
    $region12: #{_mln_forward_impl.1} parent=1 // pred_region
      %s42 = ssub.s32 512, 512
      %43 = vsyncadd [#allocation6], %s42
      %s44 = sshll.u32 [#allocation7], 4
      %s45 = int_to_ptr.vmem [resolvable:$true] %s44
      %50 = dma.hbm_to_vmem [thread:$0]  %s2, 512, %s45, [#allocation6], 128, 128, 8
    $region13: #{_mln_forward_impl.1} parent=1 // pred_fallthru
      _
    // Predicated region
    $region14: #{_mln_forward_impl.1} parent=1 // pred_check
      _
    $region15: #{_mln_forward_impl.1} parent=1 // pred_check_branch
      %52 = sbr.rel (0) target = $region17
    $region16: #{_mln_forward_impl.1} parent=1 // pred_region
      _
    $region17: #{_mln_forward_impl.1} parent=1 // pred_fallthru
      _
    // Predicated region
    $region18: #{_mln_forward_impl.1} parent=1 // pred_check
      _
    $region19: #{_mln_forward_impl.1} parent=1 // pred_check_branch
      %54 = sbr.rel (0) target = $region21
    $region20: #{_mln_forward_impl.1} parent=1 // pred_region
      %s56 = ssub.s32 4096, 4096
      %57 = vsyncadd [#allocation9], %s56
      %s58 = sshll.u32 [#allocation8], 4
      %s59 = int_to_ptr.vmem [resolvable:$true] %s58
      %64 = dma.hbm_to_vmem [thread:$0]  %s4, 4096, %s59, [#allocation9], 256, 256, 16
    $region21: #{_mln_forward_impl.1} parent=1 // pred_fallthru
      _
    // Predicated region
    $region22: #{_mln_forward_impl.1} parent=1 // pred_check
      _
    $region23: #{_mln_forward_impl.1} parent=1 // pred_check_branch
      %66 = sbr.rel (0) target = $region25
    $region24: #{_mln_forward_impl.1} parent=1 // pred_region
      _
    $region25: #{_mln_forward_impl.1} parent=1 // pred_fallthru
      _
    // Predicated region
    $region26: #{_mln_forward_impl.1} parent=1 // pred_check
      _
    $region27: #{_mln_forward_impl.1} parent=1 // pred_check_branch
      %68 = sbr.rel (0) target = $region29
    $region28: #{_mln_forward_impl.1} parent=1 // pred_region
      %69 = dma.done [#allocation3], 256
    $region29: #{_mln_forward_impl.1} parent=1 // pred_fallthru
      _
    // Predicated region
    $region30: #{_mln_forward_impl.1} parent=1 // pred_check
      _
    $region31: #{_mln_forward_impl.1} parent=1 // pred_check_branch
      %71 = sbr.rel (0) target = $region33
    $region32: #{_mln_forward_impl.1} parent=1 // pred_region
      %72 = dma.done [#allocation6], 256
    $region33: #{_mln_forward_impl.1} parent=1 // pred_fallthru
      _
    // Predicated region
    $region34: #{_mln_forward_impl.1} parent=1 // pred_check
      _
    $region35: #{_mln_forward_impl.1} parent=1 // pred_check_branch
      %74 = sbr.rel (0) target = $region37
    $region36: #{_mln_forward_impl.1} parent=1 // pred_region
      %75 = dma.done [#allocation6], 512
    $region37: #{_mln_forward_impl.1} parent=1 // pred_fallthru
      _
    // Predicated region
    $region38: #{_mln_forward_impl.1} parent=1 // pred_check
      _
    $region39: #{_mln_forward_impl.1} parent=1 // pred_check_branch
      %77 = sbr.rel (0) target = $region41
    $region40: #{_mln_forward_impl.1} parent=1 // pred_region
      %78 = dma.done [#allocation9], 4096
    $region41: #{_mln_forward_impl.1} parent=1 // pred_fallthru
      _
    %v79 = vld [vmem:[#allocation2] sm:$0xff]
    %v80 = vld [vmem:[#allocation2 + $0x8] sm:$0xff]
    %81 = vadd.xlane.f32.xlu0 %v79
    %v82 = vpop.xlane.xlu0 %81
    %83 = vadd.xlane.f32.xlu0 %v80
    %v84 = vpop.xlane.xlu0 %83
    %v85 = vrcp.pop 128.0
    %v86 = vmul.f32 %v82, %v85
    %v87 = vmul.f32 %v84, %v85
    %v88 = vsub.f32 %v79, %v86
    %v89 = vsub.f32 %v80, %v87
    %v90 = vmul.f32 %v88, %v88
    %v91 = vmul.f32 %v89, %v89
    %92 = vadd.xlane.f32.xlu0 %v90
    %v93 = vpop.xlane.xlu0 %92
    %94 = vadd.xlane.f32.xlu0 %v91
    %v95 = vpop.xlane.xlu0 %94
    %v96 = vmul.f32 %v93, %v85
    %v97 = vmul.f32 %v95, %v85
    %v98 = vadd.f32 %v96, 1e-05
    %v99 = vadd.f32 %v97, 1e-05
    %v100 = vrsqrt.pop %v98
    %v101 = vrsqrt.pop %v99
    %v102 = vmul.f32 %v88, %v100
    %v103 = vmul.f32 %v89, %v101
    %v104 = vld [vmem:[#allocation5] sm:$0xff]
    %v105 = vld [vmem:[#allocation5 + $0x8] sm:$0xff]
    %v106 = vld [vmem:[#allocation7] sm:$0xff]
    %v107 = vld [vmem:[#allocation7 + $0x8] sm:$0xff]
    %v108 = vld [vmem:[#allocation7 + $0x10] sm:$0xff]
    %v109 = vld [vmem:[#allocation7 + $0x18] sm:$0xff]
    %v110 = vld [vmem:[%s3] sm:$0x1]
    %v112 = vlaneseq
    %v113 = vshrl.u32 %v112, 7
    %v114 = vsub.s32 0, %v113
    %v115 = vrot.slane %v110, %v114
    %vm117 = vcmask 261120
    %v119 = vsel %vm117, %v104, 0
    %v122 = vsel %vm117, %v105, 0
    %124 = vmatprep.subr.mxu0 0.0
    %125 = vmatpush1.msra.mxu0 %v106
    %126 = vmatprep.subr.mxu0 0.0
    %127 = vmatpush1.msra.mxu0 %v107
    %128 = vmatprep.subr.mxu0 0.0
    %129 = vmatpush1.msra.mxu0 %v108
    %130 = vmatprep.subr.mxu0 0.0
    %131 = vmatpush1.msra.mxu0 %v109
    %132 = vmatprep.subr.mxu0 0.0
    %133 = vmatpush1.msra.mxu0 0.0
    %134 = vmatprep.subr.mxu0 0.0
    %135 = vmatpush1.msra.mxu0 0.0
    %136 = vmatprep.subr.mxu0 0.0
    %137 = vmatpush1.msra.mxu0 0.0
    %138 = vmatprep.subr.mxu0 0.0
    %139 = vmatpush1.msra.mxu0 0.0
    %140 = vmatprep.subr.mxu0 0.0
    %141 = vmatpush1.msra.mxu0 0.0
    %142 = vmatprep.subr.mxu0 0.0
    %143 = vmatpush1.msra.mxu0 0.0
    %144 = vmatprep.subr.mxu0 0.0
    %145 = vmatpush1.msra.mxu0 0.0
    %146 = vmatprep.subr.mxu0 0.0
    %147 = vmatpush1.msra.mxu0 0.0
    %148 = vmatprep.subr.mxu0 0.0
    %149 = vmatpush1.msra.mxu0 0.0
    %150 = vmatprep.subr.mxu0 0.0
    %151 = vmatpush1.msra.mxu0 0.0
    %152 = vmatprep.subr.mxu0 0.0
    %153 = vmatpush1.msra.mxu0 0.0
    %154 = vmatprep.subr.mxu0 0.0
    %155 = vmatpush1.msra.mxu0 0.0
    %156 = vmatprep.subr.mxu0 0.0
    %157 = vmatpush1.msra.mxu0 0.0
    %158 = vmatprep.subr.mxu0 0.0
    %159 = vmatpush1.msra.mxu0 0.0
    %160 = vmatprep.subr.mxu0 0.0
    %161 = vmatpush1.msra.mxu0 0.0
    %162 = vmatprep.subr.mxu0 0.0
    %163 = vmatpush1.msra.mxu0 0.0
    %164 = vmatprep.subr.mxu0 0.0
    %165 = vmatpush1.msra.mxu0 0.0
    %166 = vmatprep.subr.mxu0 0.0
    %167 = vmatpush1.msra.mxu0 0.0
    %168 = vmatprep.subr.mxu0 0.0
    %169 = vmatpush1.msra.mxu0 0.0
    %170 = vmatprep.subr.mxu0 0.0
    %171 = vmatpush1.msra.mxu0 0.0
    %172 = vmatprep.subr.mxu0 0.0
    %173 = vmatpush1.msra.mxu0 0.0
    %174 = vmatprep.subr.mxu0 0.0
    %175 = vmatpush1.msra.mxu0 0.0
    %176 = vmatprep.subr.mxu0 0.0
    %177 = vmatpush1.msra.mxu0 0.0
    %178 = vmatprep.subr.mxu0 0.0
    %179 = vmatpush1.msra.mxu0 0.0
    %180 = vmatprep.subr.mxu0 0.0
    %181 = vmatpush1.msra.mxu0 0.0
    %182 = vmatprep.subr.mxu0 0.0
    %183 = vmatpush1.msra.mxu0 0.0
    %184 = vmatprep.subr.mxu0 0.0
    %185 = vmatpush1.msra.mxu0 0.0
    %186 = vmatprep.subr.mxu0 0.0
    %187 = vmatpush1.msra.mxu0 0.0
    %188 = vmatprep.mubr.f32.mxu0 0.0
    %189 = vmatmul.mubr.f32.gmra.mrb[0].mxu0 %v119
    %v190 = vpop.f32.mrb[0].mxu0
    %v191 = vadd.f32 %v115, %v190
    %v192 = vpop.f32.mrb[0].mxu0
    %193 = vmatprep.mubr.f32.mxu0 0.0
    %194 = vmatmul.mubr.f32.gmra.mrb[0].mxu0 %v122
    %v195 = vpop.f32.mrb[0].mxu0
    %v196 = vadd.f32 %v115, %v195
    %v197 = vpop.f32.mrb[0].mxu0
    %198 = vdwg.mxu0
    %v199 = vmax.f32 %v191, 0.0
    %v200 = vmax.f32 %v196, 0.0
    %v201 = vld [vmem:[#allocation8] sm:$0xff]
    %v202 = vld [vmem:[#allocation8 + $0x8] sm:$0xff]
    %v203 = vld [vmem:[#allocation8 + $0x10] sm:$0xff]
    %v204 = vld [vmem:[#allocation8 + $0x18] sm:$0xff]
    %v205 = vld [vmem:[#allocation8 + $0x20] sm:$0xff]
    %v206 = vld [vmem:[#allocation8 + $0x28] sm:$0xff]
    %v207 = vld [vmem:[#allocation8 + $0x30] sm:$0xff]
    %v208 = vld [vmem:[#allocation8 + $0x38] sm:$0xff]
    %v209 = vld [vmem:[#allocation8 + $0x40] sm:$0xff]
    %v210 = vld [vmem:[#allocation8 + $0x48] sm:$0xff]
    %v211 = vld [vmem:[#allocation8 + $0x50] sm:$0xff]
    %v212 = vld [vmem:[#allocation8 + $0x58] sm:$0xff]
    %v213 = vld [vmem:[#allocation8 + $0x60] sm:$0xff]
    %v214 = vld [vmem:[#allocation8 + $0x68] sm:$0xff]
    %v215 = vld [vmem:[#allocation8 + $0x70] sm:$0xff]
    %v216 = vld [vmem:[#allocation8 + $0x78] sm:$0xff]
    %v217 = vld [vmem:[#allocation8 + $0x80] sm:$0xff]
    %v218 = vld [vmem:[#allocation8 + $0x88] sm:$0xff]
    %v219 = vld [vmem:[#allocation8 + $0x90] sm:$0xff]
    %v220 = vld [vmem:[#allocation8 + $0x98] sm:$0xff]
    %v221 = vld [vmem:[#allocation8 + $0xa0] sm:$0xff]
    %v222 = vld [vmem:[#allocation8 + $0xa8] sm:$0xff]
    %v223 = vld [vmem:[#allocation8 + $0xb0] sm:$0xff]
    %v224 = vld [vmem:[#allocation8 + $0xb8] sm:$0xff]
    %v225 = vld [vmem:[#allocation8 + $0xc0] sm:$0xff]
    %v226 = vld [vmem:[#allocation8 + $0xc8] sm:$0xff]
    %v227 = vld [vmem:[#allocation8 + $0xd0] sm:$0xff]
    %v228 = vld [vmem:[#allocation8 + $0xd8] sm:$0xff]
    %v229 = vld [vmem:[#allocation8 + $0xe0] sm:$0xff]
    %v230 = vld [vmem:[#allocation8 + $0xe8] sm:$0xff]
    %v231 = vld [vmem:[#allocation8 + $0xf0] sm:$0xff]
    %v232 = vld [vmem:[#allocation8 + $0xf8] sm:$0xff]
    %v233 = vld [vmem:[%s5] sm:$0x3]
    %v235 = vlaneseq
    %v236 = vshrl.u32 %v235, 7
    %v237 = vsub.s32 0, %v236
    %v238 = vrot.slane %v233, %v237
    %v239 = vlaneseq
    %v240 = vshrl.u32 %v239, 7
    %v241 = vsub.s32 1, %v240
    %v242 = vrot.slane %v233, %v241
    %245 = vmatprep.subr.mxu0 %v202
    %246 = vmatpush1.msra.mxu0 %v201
    %247 = vmatprep.subr.mxu0 %v204
    %248 = vmatpush1.msra.mxu0 %v203
    %249 = vmatprep.subr.mxu0 %v206
    %250 = vmatpush1.msra.mxu0 %v205
    %251 = vmatprep.subr.mxu0 %v208
    %252 = vmatpush1.msra.mxu0 %v207
    %253 = vmatprep.subr.mxu0 %v210
    %254 = vmatpush1.msra.mxu0 %v209
    %255 = vmatprep.subr.mxu0 %v212
    %256 = vmatpush1.msra.mxu0 %v211
    %257 = vmatprep.subr.mxu0 %v214
    %258 = vmatpush1.msra.mxu0 %v213
    %259 = vmatprep.subr.mxu0 %v216
    %260 = vmatpush1.msra.mxu0 %v215
    %261 = vmatprep.subr.mxu0 %v218
    %262 = vmatpush1.msra.mxu0 %v217
    %263 = vmatprep.subr.mxu0 %v220
    %264 = vmatpush1.msra.mxu0 %v219
    %265 = vmatprep.subr.mxu0 %v222
    %266 = vmatpush1.msra.mxu0 %v221
    %267 = vmatprep.subr.mxu0 %v224
    %268 = vmatpush1.msra.mxu0 %v223
    %269 = vmatprep.subr.mxu0 %v226
    %270 = vmatpush1.msra.mxu0 %v225
    %271 = vmatprep.subr.mxu0 %v228
    %272 = vmatpush1.msra.mxu0 %v227
    %273 = vmatprep.subr.mxu0 %v230
    %274 = vmatpush1.msra.mxu0 %v229
    %275 = vmatprep.subr.mxu0 %v232
    %276 = vmatpush1.msra.mxu0 %v231
    %277 = vmatprep.subr.mxu0 0.0
    %278 = vmatpush1.msra.mxu0 0.0
    %279 = vmatprep.subr.mxu0 0.0
    %280 = vmatpush1.msra.mxu0 0.0
    %281 = vmatprep.subr.mxu0 0.0
    %282 = vmatpush1.msra.mxu0 0.0
    %283 = vmatprep.subr.mxu0 0.0
    %284 = vmatpush1.msra.mxu0 0.0
    %285 = vmatprep.subr.mxu0 0.0
    %286 = vmatpush1.msra.mxu0 0.0
    %287 = vmatprep.subr.mxu0 0.0
    %288 = vmatpush1.msra.mxu0 0.0
    %289 = vmatprep.subr.mxu0 0.0
    %290 = vmatpush1.msra.mxu0 0.0
    %291 = vmatprep.subr.mxu0 0.0
    %292 = vmatpush1.msra.mxu0 0.0
    %293 = vmatprep.subr.mxu0 0.0
    %294 = vmatpush1.msra.mxu0 0.0
    %295 = vmatprep.subr.mxu0 0.0
    %296 = vmatpush1.msra.mxu0 0.0
    %297 = vmatprep.subr.mxu0 0.0
    %298 = vmatpush1.msra.mxu0 0.0
    %299 = vmatprep.subr.mxu0 0.0
    %300 = vmatpush1.msra.mxu0 0.0
    %301 = vmatprep.subr.mxu0 0.0
    %302 = vmatpush1.msra.mxu0 0.0
    %303 = vmatprep.subr.mxu0 0.0
    %304 = vmatpush1.msra.mxu0 0.0
    %305 = vmatprep.subr.mxu0 0.0
    %306 = vmatpush1.msra.mxu0 0.0
    %307 = vmatprep.subr.mxu0 0.0
    %308 = vmatpush1.msra.mxu0 0.0
    %309 = vmatprep.mubr.f32.mxu0 0.0
    %310 = vmatmul.mubr.f32.gmra.mrb[0].mxu0 %v199
    %v311 = vpop.f32.mrb[0].mxu0
    %v312 = vadd.f32 %v238, %v311
    %v313 = vpop.f32.mrb[0].mxu0
    %v314 = vadd.f32 %v242, %v313
    %315 = vmatprep.mubr.f32.mxu0 0.0
    %316 = vmatmul.mubr.f32.gmra.mrb[0].mxu0 %v200
    %v317 = vpop.f32.mrb[0].mxu0
    %v318 = vadd.f32 %v238, %v317
    %v319 = vpop.f32.mrb[0].mxu0
    %v320 = vadd.f32 %v242, %v319
    %321 = vdwg.mxu0
    %v322 = vmul.f32 %v312, %v102
    %v323 = vmul.f32 %v318, %v103
    %v324 = vadd.f32 %v322, %v314
    %v325 = vadd.f32 %v323, %v320
    %326 = vst [vmem:[#allocation10] sm:$0xff] %v324
    %327 = vst [vmem:[#allocation10 + $0x8] sm:$0xff] %v325
    // Predicated region
    $region42: #{_mln_forward_impl.1} parent=1 // pred_check
      _
    $region43: #{_mln_forward_impl.1} parent=1 // pred_check_branch
      %329 = sbr.rel (0) target = $region45
    $region44: #{_mln_forward_impl.1} parent=1 // pred_region
      %s331 = ssub.s32 256, 256
      %332 = vsyncadd [#allocation4], %s331
      %s333 = sshll.u32 [#allocation10], 4
      %s334 = int_to_ptr.vmem [resolvable:$true] %s333
      %339 = dma.vmem_to_hbm [thread:$0]  %s334, 256, %s6, [#allocation4], 128, 128, 8
    $region45: #{_mln_forward_impl.1} parent=1 // pred_fallthru
      _
    // Predicated region
    $region46: #{_mln_forward_impl.1} parent=1 // pred_check
      _
    $region47: #{_mln_forward_impl.1} parent=1 // pred_check_branch
      %341 = sbr.rel (0) target = $region49
    $region48: #{_mln_forward_impl.1} parent=1 // pred_region
      %342 = dma.done [#allocation4], 256
    $region49: #{_mln_forward_impl.1} parent=1 // pred_fallthru
      _
    %343 = vsyncpa [#allocation3], 1
    %344 = vsyncpa [#allocation6], 1
    %345 = vsyncpa [#allocation9], 1
    %346 = vsyncpa [#allocation4], 1

// kernel: _mln_forward_impl.1
$region0: #{_mln_forward_impl.1}
  #allocation0 [shape = 'u32[]', space=smem, size = 0x4, offset = 0x4, fixed_abs, tag = 'smem constant byte address 0x4 - core index']
  #allocation1 [shape = 'u32[144,128]{1,0:T(1,128)}', space=vmem, size = 0x12000, scoped, tag = 'internal scratch']
  %s0 = inlined_call_operand.hbm [shape: f32[16,128], index: 0, kind: input, shape index: {}]
  %s1 = inlined_call_operand.hbm [shape: f32[16,32], index: 1, kind: input, shape index: {}]
  %s2 = inlined_call_operand.hbm [shape: f32[32,128], index: 2, kind: input, shape index: {}]
  %s3 = inlined_call_operand.vmem [shape: f32[1,128], index: 3, kind: input, shape index: {}]
  %s4 = inlined_call_operand.hbm [shape: f32[128,256], index: 4, kind: input, shape index: {}]
  %s5 = inlined_call_operand.vmem [shape: f32[1,256], index: 5, kind: input, shape index: {}]
  %s6 = inlined_call_operand.hbm [shape: f32[16,128], index: 6, kind: output, shape index: {}]
  %s7 = sld [smem:[#allocation0]]
  $region50: #{_mln_forward_impl.1} parent=0
    _
  %s9 = ssub.s32 1, %s7
  %s10 = scalar_select 0, %s9, %s7
  $region1: #{_mln_forward_impl.1} parent=0
    #allocation2 [shape = 'u8[8192]{0}', space=vmem, size = 0x2000, scoped, tag = 'input window, operand 0, single buffered']
    #allocation3 [shape = 's32[1]{0}', space=sflag, size = 0x4, scoped, tag = 'scoped memory for _mln_forward_impl.1']
    #allocation4 [shape = 's32[1]{0}', space=sflag, size = 0x4, scoped, tag = 'scoped memory for _mln_forward_impl.1']
    #allocation5 [shape = 'u8[8192]{0}', space=vmem, size = 0x2000, scoped, tag = 'input window, operand 1, single buffered']
    #allocation6 [shape = 's32[1]{0}', space=sflag, size = 0x4, scoped, tag = 'scoped memory for _mln_forward_impl.1']
    #allocation7 [shape = 'u8[16384]{0}', space=vmem, size = 0x4000, scoped, tag = 'input window, operand 2, single buffered']
    #allocation8 [shape = 'u8[131072]{0}', space=vmem, size = 0x20000, scoped, tag = 'input window, operand 4, single buffered']
    #allocation9 [shape = 's32[1]{0}', space=sflag, size = 0x4, scoped, tag = 'scoped memory for _mln_forward_impl.1']
    #allocation10 [shape = 'u8[8192]{0}', space=vmem, size = 0x2000, scoped, tag = 'output window, operand 0, single buffered']
    %11 = vsyncpa [#allocation3], 0
    %12 = vsyncpa [#allocation6], 0
    %13 = vsyncpa [#allocation9], 0
    %14 = vsyncpa [#allocation4], 0
    // Predicated region
    $region2: #{_mln_forward_impl.1} parent=1 // pred_check
      _
    $region3: #{_mln_forward_impl.1} parent=1 // pred_check_branch
      %16 = sbr.rel (0) target = $region5
    $region4: #{_mln_forward_impl.1} parent=1 // pred_region
      %s18 = ssub.s32 256, 256
      %19 = vsyncadd [#allocation3], %s18
      %s20 = sshll.u32 [#allocation2], 4
      %s21 = int_to_ptr.vmem [resolvable:$true] %s20
      %26 = dma.hbm_to_vmem [thread:$0]  %s0, 256, %s21, [#allocation3], 128, 128, 8
    $region5: #{_mln_forward_impl.1} parent=1 // pred_fallthru
      _
    // Predicated region
    $region6: #{_mln_forward_impl.1} parent=1 // pred_check
      _
    $region7: #{_mln_forward_impl.1} parent=1 // pred_check_branch
      %28 = sbr.rel (0) target = $region9
    $region8: #{_mln_forward_impl.1} parent=1 // pred_region
      %s30 = ssub.s32 256, 256
      %31 = vsyncadd [#allocation6], %s30
      %s32 = sshll.u32 [#allocation5], 4
      %s33 = int_to_ptr.vmem [resolvable:$true] %s32
      %38 = dma.hbm_to_vmem [thread:$0]  %s1, 256, %s33, [#allocation6], 128, 128, 8
    $region9: #{_mln_forward_impl.1} parent=1 // pred_fallthru
      _
    // Predicated region
    $region10: #{_mln_forward_impl.1} parent=1 // pred_check
      _
    $region11: #{_mln_forward_impl.1} parent=1 // pred_check_branch
      %40 = sbr.rel (0) target = $region13
    $region12: #{_mln_forward_impl.1} parent=1 // pred_region
      %s42 = ssub.s32 512, 512
      %43 = vsyncadd [#allocation6], %s42
      %s44 = sshll.u32 [#allocation7], 4
      %s45 = int_to_ptr.vmem [resolvable:$true] %s44
      %50 = dma.hbm_to_vmem [thread:$0]  %s2, 512, %s45, [#allocation6], 128, 128, 8
    $region13: #{_mln_forward_impl.1} parent=1 // pred_fallthru
      _
    // Predicated region
    $region14: #{_mln_forward_impl.1} parent=1 // pred_check
      _
    $region15: #{_mln_forward_impl.1} parent=1 // pred_check_branch
      %52 = sbr.rel (0) target = $region17
    $region16: #{_mln_forward_impl.1} parent=1 // pred_region
      _
    $region17: #{_mln_forward_impl.1} parent=1 // pred_fallthru
      _
    // Predicated region
    $region18: #{_mln_forward_impl.1} parent=1 // pred_check
      _
    $region19: #{_mln_forward_impl.1} parent=1 // pred_check_branch
      %54 = sbr.rel (0) target = $region21
    $region20: #{_mln_forward_impl.1} parent=1 // pred_region
      %s56 = ssub.s32 4096, 4096
      %57 = vsyncadd [#allocation9], %s56
      %s58 = sshll.u32 [#allocation8], 4
      %s59 = int_to_ptr.vmem [resolvable:$true] %s58
      %64 = dma.hbm_to_vmem [thread:$0]  %s4, 4096, %s59, [#allocation9], 256, 256, 16
    $region21: #{_mln_forward_impl.1} parent=1 // pred_fallthru
      _
    // Predicated region
    $region22: #{_mln_forward_impl.1} parent=1 // pred_check
      _
    $region23: #{_mln_forward_impl.1} parent=1 // pred_check_branch
      %66 = sbr.rel (0) target = $region25
    $region24: #{_mln_forward_impl.1} parent=1 // pred_region
      _
    $region25: #{_mln_forward_impl.1} parent=1 // pred_fallthru
      _
    // Predicated region
    $region26: #{_mln_forward_impl.1} parent=1 // pred_check
      _
    $region27: #{_mln_forward_impl.1} parent=1 // pred_check_branch
      %68 = sbr.rel (0) target = $region29
    $region28: #{_mln_forward_impl.1} parent=1 // pred_region
      %69 = dma.done [#allocation3], 256
    $region29: #{_mln_forward_impl.1} parent=1 // pred_fallthru
      _
    // Predicated region
    $region30: #{_mln_forward_impl.1} parent=1 // pred_check
      _
    $region31: #{_mln_forward_impl.1} parent=1 // pred_check_branch
      %71 = sbr.rel (0) target = $region33
    $region32: #{_mln_forward_impl.1} parent=1 // pred_region
      %72 = dma.done [#allocation6], 256
    $region33: #{_mln_forward_impl.1} parent=1 // pred_fallthru
      _
    // Predicated region
    $region34: #{_mln_forward_impl.1} parent=1 // pred_check
      _
    $region35: #{_mln_forward_impl.1} parent=1 // pred_check_branch
      %74 = sbr.rel (0) target = $region37
    $region36: #{_mln_forward_impl.1} parent=1 // pred_region
      %75 = dma.done [#allocation6], 512
    $region37: #{_mln_forward_impl.1} parent=1 // pred_fallthru
      _
    // Predicated region
    $region38: #{_mln_forward_impl.1} parent=1 // pred_check
      _
    $region39: #{_mln_forward_impl.1} parent=1 // pred_check_branch
      %77 = sbr.rel (0) target = $region41
    $region40: #{_mln_forward_impl.1} parent=1 // pred_region
      %78 = dma.done [#allocation9], 4096
    $region41: #{_mln_forward_impl.1} parent=1 // pred_fallthru
      _
    %v79 = vld [vmem:[#allocation2] sm:$0xff]
    %v80 = vld [vmem:[#allocation2 + $0x8] sm:$0xff]
    %81 = vadd.xlane.f32.xlu0 %v79
    %v82 = vpop.xlane.xlu0 %81
    %83 = vadd.xlane.f32.xlu0 %v80
    %v84 = vpop.xlane.xlu0 %83
    %v85 = vrcp.pop 128.0
    %v86 = vmul.f32 %v82, %v85
    %v87 = vmul.f32 %v84, %v85
    %v88 = vsub.f32 %v79, %v86
    %v89 = vsub.f32 %v80, %v87
    %v90 = vmul.f32 %v88, %v88
    %v91 = vmul.f32 %v89, %v89
    %92 = vadd.xlane.f32.xlu0 %v90
    %v93 = vpop.xlane.xlu0 %92
    %94 = vadd.xlane.f32.xlu0 %v91
    %v95 = vpop.xlane.xlu0 %94
    %v96 = vmul.f32 %v93, %v85
    %v97 = vmul.f32 %v95, %v85
    %v98 = vadd.f32 %v96, 1e-05
    %v99 = vadd.f32 %v97, 1e-05
    %v100 = vrsqrt.pop %v98
    %v101 = vrsqrt.pop %v99
    %v102 = vmul.f32 %v88, %v100
    %v103 = vmul.f32 %v89, %v101
    %v104 = vld [vmem:[#allocation5] sm:$0xff]
    %v105 = vld [vmem:[#allocation5 + $0x8] sm:$0xff]
    %v106 = vld [vmem:[#allocation7] sm:$0xff]
    %v107 = vld [vmem:[#allocation7 + $0x8] sm:$0xff]
    %v108 = vld [vmem:[#allocation7 + $0x10] sm:$0xff]
    %v109 = vld [vmem:[#allocation7 + $0x18] sm:$0xff]
    %v110 = vld [vmem:[%s3] sm:$0x1]
    %v112 = vlaneseq
    %v113 = vshrl.u32 %v112, 7
    %v114 = vsub.s32 0, %v113
    %v115 = vrot.slane %v110, %v114
    %vm117 = vcmask 261120
    %v119 = vsel %vm117, %v104, 0
    %v122 = vsel %vm117, %v105, 0
    %124 = vmatprep.subr.mxu0 0.0
    %125 = vmatpush1.msra.mxu0 %v106
    %126 = vmatprep.subr.mxu0 0.0
    %127 = vmatpush1.msra.mxu0 %v107
    %128 = vmatprep.subr.mxu0 0.0
    %129 = vmatpush1.msra.mxu0 %v108
    %130 = vmatprep.subr.mxu0 0.0
    %131 = vmatpush1.msra.mxu0 %v109
    %132 = vmatprep.subr.mxu0 0.0
    %133 = vmatpush1.msra.mxu0 0.0
    %134 = vmatprep.subr.mxu0 0.0
    %135 = vmatpush1.msra.mxu0 0.0
    %136 = vmatprep.subr.mxu0 0.0
    %137 = vmatpush1.msra.mxu0 0.0
    %138 = vmatprep.subr.mxu0 0.0
    %139 = vmatpush1.msra.mxu0 0.0
    %140 = vmatprep.subr.mxu0 0.0
    %141 = vmatpush1.msra.mxu0 0.0
    %142 = vmatprep.subr.mxu0 0.0
    %143 = vmatpush1.msra.mxu0 0.0
    %144 = vmatprep.subr.mxu0 0.0
    %145 = vmatpush1.msra.mxu0 0.0
    %146 = vmatprep.subr.mxu0 0.0
    %147 = vmatpush1.msra.mxu0 0.0
    %148 = vmatprep.subr.mxu0 0.0
    %149 = vmatpush1.msra.mxu0 0.0
    %150 = vmatprep.subr.mxu0 0.0
    %151 = vmatpush1.msra.mxu0 0.0
    %152 = vmatprep.subr.mxu0 0.0
    %153 = vmatpush1.msra.mxu0 0.0
    %154 = vmatprep.subr.mxu0 0.0
    %155 = vmatpush1.msra.mxu0 0.0
    %156 = vmatprep.subr.mxu0 0.0
    %157 = vmatpush1.msra.mxu0 0.0
    %158 = vmatprep.subr.mxu0 0.0
    %159 = vmatpush1.msra.mxu0 0.0
    %160 = vmatprep.subr.mxu0 0.0
    %161 = vmatpush1.msra.mxu0 0.0
    %162 = vmatprep.subr.mxu0 0.0
    %163 = vmatpush1.msra.mxu0 0.0
    %164 = vmatprep.subr.mxu0 0.0
    %165 = vmatpush1.msra.mxu0 0.0
    %166 = vmatprep.subr.mxu0 0.0
    %167 = vmatpush1.msra.mxu0 0.0
    %168 = vmatprep.subr.mxu0 0.0
    %169 = vmatpush1.msra.mxu0 0.0
    %170 = vmatprep.subr.mxu0 0.0
    %171 = vmatpush1.msra.mxu0 0.0
    %172 = vmatprep.subr.mxu0 0.0
    %173 = vmatpush1.msra.mxu0 0.0
    %174 = vmatprep.subr.mxu0 0.0
    %175 = vmatpush1.msra.mxu0 0.0
    %176 = vmatprep.subr.mxu0 0.0
    %177 = vmatpush1.msra.mxu0 0.0
    %178 = vmatprep.subr.mxu0 0.0
    %179 = vmatpush1.msra.mxu0 0.0
    %180 = vmatprep.subr.mxu0 0.0
    %181 = vmatpush1.msra.mxu0 0.0
    %182 = vmatprep.subr.mxu0 0.0
    %183 = vmatpush1.msra.mxu0 0.0
    %184 = vmatprep.subr.mxu0 0.0
    %185 = vmatpush1.msra.mxu0 0.0
    %186 = vmatprep.subr.mxu0 0.0
    %187 = vmatpush1.msra.mxu0 0.0
    %188 = vmatprep.mubr.f32.mxu0 0.0
    %189 = vmatmul.mubr.f32.gmra.mrb[0].mxu0 %v119
    %v190 = vpop.f32.mrb[0].mxu0
    %v191 = vadd.f32 %v115, %v190
    %v192 = vpop.f32.mrb[0].mxu0
    %193 = vmatprep.mubr.f32.mxu0 0.0
    %194 = vmatmul.mubr.f32.gmra.mrb[0].mxu0 %v122
    %v195 = vpop.f32.mrb[0].mxu0
    %v196 = vadd.f32 %v115, %v195
    %v197 = vpop.f32.mrb[0].mxu0
    %198 = vdwg.mxu0
    %v199 = vmax.f32 %v191, 0.0
    %v200 = vmax.f32 %v196, 0.0
    %v201 = vld [vmem:[#allocation8] sm:$0xff]
    %v202 = vld [vmem:[#allocation8 + $0x8] sm:$0xff]
    %v203 = vld [vmem:[#allocation8 + $0x10] sm:$0xff]
    %v204 = vld [vmem:[#allocation8 + $0x18] sm:$0xff]
    %v205 = vld [vmem:[#allocation8 + $0x20] sm:$0xff]
    %v206 = vld [vmem:[#allocation8 + $0x28] sm:$0xff]
    %v207 = vld [vmem:[#allocation8 + $0x30] sm:$0xff]
    %v208 = vld [vmem:[#allocation8 + $0x38] sm:$0xff]
    %v209 = vld [vmem:[#allocation8 + $0x40] sm:$0xff]
    %v210 = vld [vmem:[#allocation8 + $0x48] sm:$0xff]
    %v211 = vld [vmem:[#allocation8 + $0x50] sm:$0xff]
    %v212 = vld [vmem:[#allocation8 + $0x58] sm:$0xff]
    %v213 = vld [vmem:[#allocation8 + $0x60] sm:$0xff]
    %v214 = vld [vmem:[#allocation8 + $0x68] sm:$0xff]
    %v215 = vld [vmem:[#allocation8 + $0x70] sm:$0xff]
    %v216 = vld [vmem:[#allocation8 + $0x78] sm:$0xff]
    %v217 = vld [vmem:[#allocation8 + $0x80] sm:$0xff]
    %v218 = vld [vmem:[#allocation8 + $0x88] sm:$0xff]
    %v219 = vld [vmem:[#allocation8 + $0x90] sm:$0xff]
    %v220 = vld [vmem:[#allocation8 + $0x98] sm:$0xff]
    %v221 = vld [vmem:[#allocation8 + $0xa0] sm:$0xff]
    %v222 = vld [vmem:[#allocation8 + $0xa8] sm:$0xff]
    %v223 = vld [vmem:[#allocation8 + $0xb0] sm:$0xff]
    %v224 = vld [vmem:[#allocation8 + $0xb8] sm:$0xff]
    %v225 = vld [vmem:[#allocation8 + $0xc0] sm:$0xff]
    %v226 = vld [vmem:[#allocation8 + $0xc8] sm:$0xff]
    %v227 = vld [vmem:[#allocation8 + $0xd0] sm:$0xff]
    %v228 = vld [vmem:[#allocation8 + $0xd8] sm:$0xff]
    %v229 = vld [vmem:[#allocation8 + $0xe0] sm:$0xff]
    %v230 = vld [vmem:[#allocation8 + $0xe8] sm:$0xff]
    %v231 = vld [vmem:[#allocation8 + $0xf0] sm:$0xff]
    %v232 = vld [vmem:[#allocation8 + $0xf8] sm:$0xff]
    %v233 = vld [vmem:[%s5] sm:$0x3]
    %v235 = vlaneseq
    %v236 = vshrl.u32 %v235, 7
    %v237 = vsub.s32 0, %v236
    %v238 = vrot.slane %v233, %v237
    %v239 = vlaneseq
    %v240 = vshrl.u32 %v239, 7
    %v241 = vsub.s32 1, %v240
    %v242 = vrot.slane %v233, %v241
    %245 = vmatprep.subr.mxu0 %v202
    %246 = vmatpush1.msra.mxu0 %v201
    %247 = vmatprep.subr.mxu0 %v204
    %248 = vmatpush1.msra.mxu0 %v203
    %249 = vmatprep.subr.mxu0 %v206
    %250 = vmatpush1.msra.mxu0 %v205
    %251 = vmatprep.subr.mxu0 %v208
    %252 = vmatpush1.msra.mxu0 %v207
    %253 = vmatprep.subr.mxu0 %v210
    %254 = vmatpush1.msra.mxu0 %v209
    %255 = vmatprep.subr.mxu0 %v212
    %256 = vmatpush1.msra.mxu0 %v211
    %257 = vmatprep.subr.mxu0 %v214
    %258 = vmatpush1.msra.mxu0 %v213
    %259 = vmatprep.subr.mxu0 %v216
    %260 = vmatpush1.msra.mxu0 %v215
    %261 = vmatprep.subr.mxu0 %v218
    %262 = vmatpush1.msra.mxu0 %v217
    %263 = vmatprep.subr.mxu0 %v220
    %264 = vmatpush1.msra.mxu0 %v219
    %265 = vmatprep.subr.mxu0 %v222
    %266 = vmatpush1.msra.mxu0 %v221
    %267 = vmatprep.subr.mxu0 %v224
    %268 = vmatpush1.msra.mxu0 %v223
    %269 = vmatprep.subr.mxu0 %v226
    %270 = vmatpush1.msra.mxu0 %v225
    %271 = vmatprep.subr.mxu0 %v228
    %272 = vmatpush1.msra.mxu0 %v227
    %273 = vmatprep.subr.mxu0 %v230
    %274 = vmatpush1.msra.mxu0 %v229
    %275 = vmatprep.subr.mxu0 %v232
    %276 = vmatpush1.msra.mxu0 %v231
    %277 = vmatprep.subr.mxu0 0.0
    %278 = vmatpush1.msra.mxu0 0.0
    %279 = vmatprep.subr.mxu0 0.0
    %280 = vmatpush1.msra.mxu0 0.0
    %281 = vmatprep.subr.mxu0 0.0
    %282 = vmatpush1.msra.mxu0 0.0
    %283 = vmatprep.subr.mxu0 0.0
    %284 = vmatpush1.msra.mxu0 0.0
    %285 = vmatprep.subr.mxu0 0.0
    %286 = vmatpush1.msra.mxu0 0.0
    %287 = vmatprep.subr.mxu0 0.0
    %288 = vmatpush1.msra.mxu0 0.0
    %289 = vmatprep.subr.mxu0 0.0
    %290 = vmatpush1.msra.mxu0 0.0
    %291 = vmatprep.subr.mxu0 0.0
    %292 = vmatpush1.msra.mxu0 0.0
    %293 = vmatprep.subr.mxu0 0.0
    %294 = vmatpush1.msra.mxu0 0.0
    %295 = vmatprep.subr.mxu0 0.0
    %296 = vmatpush1.msra.mxu0 0.0
    %297 = vmatprep.subr.mxu0 0.0
    %298 = vmatpush1.msra.mxu0 0.0
    %299 = vmatprep.subr.mxu0 0.0
    %300 = vmatpush1.msra.mxu0 0.0
    %301 = vmatprep.subr.mxu0 0.0
    %302 = vmatpush1.msra.mxu0 0.0
    %303 = vmatprep.subr.mxu0 0.0
    %304 = vmatpush1.msra.mxu0 0.0
    %305 = vmatprep.subr.mxu0 0.0
    %306 = vmatpush1.msra.mxu0 0.0
    %307 = vmatprep.subr.mxu0 0.0
    %308 = vmatpush1.msra.mxu0 0.0
    %309 = vmatprep.mubr.f32.mxu0 0.0
    %310 = vmatmul.mubr.f32.gmra.mrb[0].mxu0 %v199
    %v311 = vpop.f32.mrb[0].mxu0
    %v312 = vadd.f32 %v238, %v311
    %v313 = vpop.f32.mrb[0].mxu0
    %v314 = vadd.f32 %v242, %v313
    %315 = vmatprep.mubr.f32.mxu0 0.0
    %316 = vmatmul.mubr.f32.gmra.mrb[0].mxu0 %v200
    %v317 = vpop.f32.mrb[0].mxu0
    %v318 = vadd.f32 %v238, %v317
    %v319 = vpop.f32.mrb[0].mxu0
    %v320 = vadd.f32 %v242, %v319
    %321 = vdwg.mxu0
    %v322 = vmul.f32 %v312, %v102
    %v323 = vmul.f32 %v318, %v103
    %v324 = vadd.f32 %v322, %v314
    %v325 = vadd.f32 %v323, %v320
    %326 = vst [vmem:[#allocation10] sm:$0xff] %v324
    %327 = vst [vmem:[#allocation10 + $0x8] sm:$0xff] %v325
    // Predicated region
    $region42: #{_mln_forward_impl.1} parent=1 // pred_check
      _
    $region43: #{_mln_forward_impl.1} parent=1 // pred_check_branch
      %329 = sbr.rel (0) target = $region45
    $region44: #{_mln_forward_impl.1} parent=1 // pred_region
      %s331 = ssub.s32 256, 256
      %332 = vsyncadd [#allocation4], %s331
      %s333 = sshll.u32 [#allocation10], 4
      %s334 = int_to_ptr.vmem [resolvable:$true] %s333
      %339 = dma.vmem_to_hbm [thread:$0]  %s334, 256, %s6, [#allocation4], 128, 128, 8
    $region45: #{_mln_forward_impl.1} parent=1 // pred_fallthru
      _
    // Predicated region
    $region46: #{_mln_forward_impl.1} parent=1 // pred_check
      _
    $region47: #{_mln_forward_impl.1} parent=1 // pred_check_branch
      %341 = sbr.rel (0) target = $region49
    $region48: #{_mln_forward_impl.1} parent=1 // pred_region
      %342 = dma.done [#allocation4], 256
    $region49: #{_mln_forward_impl.1} parent=1 // pred_fallthru
      _
    %343 = vsyncpa [#allocation3], 1
    %344 = vsyncpa [#allocation6], 1
    %345 = vsyncpa [#allocation9], 1
    %346 = vsyncpa [#allocation4], 1

</llo_original>
